<compile_context>
chip_gen: v5e
topology: v5e:2x2
jax: 0.10.0
libtpu: 0.0.40
codegen_flags: <defaults>
</compile_context>

<pallas_src>
import functools

import jax
import jax.numpy as jnp
from jax.experimental import pallas as pl
from jax.experimental.pallas import tpu as pltpu


LANE = 128                          # lane width / feature-dim padding granule
TILE_M = 1024                       # A_hat row tile (output rows)
TILE_K = 512                        # A_hat reduction (K) tile
VMEM_LIMIT = 48 * 1024 * 1024       # explicit; safe on v5e/v6e/v7x
XW_RESIDENT_BUDGET = 16 * 1024 * 1024  # keep XW whole in VMEM if it fits this


def _round_up(x, m):
    return ((x + m - 1) // m) * m


def _pad2d(a, rows, cols, dtype):
    """Zero-pad a 2-D array to (rows, cols) and cast to dtype."""
    out = jnp.zeros((rows, cols), dtype=dtype)
    return out.at[: a.shape[0], : a.shape[1]].set(a.astype(dtype))


def _pick_row_tile(n_pad):
    """Largest row tile dividing n_pad that leaves >= 2 row tiles so the
    'parallel' axis can shard across both v7x TensorCores."""
    for t in (TILE_M, 512, 256, 128, 64, 32, 16, 8):
        if n_pad % t == 0 and n_pad // t >= 2:
            return t
    return n_pad


# ----------------------------------------------------------------------------
# Kernel 1: feature transform  XW = X @ W   (row-tiled, bf16 in, bf16 out)
# ----------------------------------------------------------------------------
def _xw_kernel(x_ref, w_ref, o_ref):
    o_ref[...] = jnp.dot(
        x_ref[...], w_ref[...], preferred_element_type=jnp.float32
    ).astype(o_ref.dtype)


# ----------------------------------------------------------------------------
# Kernel 2: aggregation  out = act( A_hat @ XW + b )
#   grid = (row tiles, K tiles); f32 accumulator in VMEM scratch;
#   bias + relu applied once in the finalize step (last K iteration).
#   If xw_resident, xw_ref holds the whole (n_pad, f_out_pad) panel and is
#   sliced per K step in-kernel (no re-DMA across row tiles).
# ----------------------------------------------------------------------------
def _agg_kernel(a_ref, xw_ref, b_ref, o_ref, acc_ref, *,
                apply_relu, xw_resident, tile_k):
    k = pl.program_id(1)

    @pl.when(k == 0)
    def _():
        acc_ref[...] = jnp.zeros_like(acc_ref)

    if xw_resident:
        start = pl.multiple_of(k * tile_k, tile_k)
        xw_blk = xw_ref[pl.ds(start, tile_k), :]
    else:
        xw_blk = xw_ref[...]

    acc_ref[...] += jnp.dot(
        a_ref[...], xw_blk, preferred_element_type=jnp.float32
    )

    @pl.when(k == pl.num_programs(1) - 1)
    def _():
        out = acc_ref[...] + b_ref[...]
        if apply_relu:
            out = jnp.maximum(out, 0.0)
        o_ref[...] = out.astype(o_ref.dtype)


# ----------------------------------------------------------------------------
# One GCNConv layer on padded bf16 inputs.
#   a_pad : (n_pad, n_pad)     bf16, zero-padded normalized adjacency
#   x_pad : (n_pad, f_in_pad)  bf16 padded node features / hidden state
#   w     : (f_in, f_out)      f32 weights (unpadded)
#   b     : (f_out,)           f32 bias    (unpadded)
# Returns padded output of shape (n_pad, round_up(f_out, 128)) in out_dtype.
# ----------------------------------------------------------------------------
def gcn_layer(a_pad, x_pad, w, b, *, apply_relu, tile_m, tile_k, out_dtype):
    n_pad = a_pad.shape[0]
    f_in, f_out = w.shape
    f_in_pad = x_pad.shape[1]
    f_out_pad = _round_up(f_out, LANE)
    assert f_in_pad == _round_up(f_in, LANE)
    assert n_pad % tile_m == 0 and n_pad % tile_k == 0

    w_pad = _pad2d(w, f_in_pad, f_out_pad, jnp.bfloat16)
    b_pad = _pad2d(b.reshape(1, -1), 1, f_out_pad, jnp.float32)

    n_row = n_pad // tile_m
    n_k = n_pad // tile_k

    # ---- Stage 1: XW = X @ W (computed once, bf16 out) ---------------------
    xw = pl.pallas_call(
        _xw_kernel,
        out_shape=jax.ShapeDtypeStruct((n_pad, f_out_pad), jnp.bfloat16),
        grid=(n_row,),
        in_specs=[
            pl.BlockSpec((tile_m, f_in_pad), lambda i: (i, 0)),
            pl.BlockSpec((f_in_pad, f_out_pad), lambda i: (0, 0)),
        ],
        out_specs=pl.BlockSpec((tile_m, f_out_pad), lambda i: (i, 0)),
        compiler_params=pltpu.CompilerParams(
            dimension_semantics=("parallel",),
            vmem_limit_bytes=VMEM_LIMIT,
        ),
    )(x_pad, w_pad)

    # ---- Stage 2: out = act( A_hat @ XW + b ), K-tiled accumulator ---------
    xw_resident = 2 * n_pad * f_out_pad * 2 <= XW_RESIDENT_BUDGET
    if xw_resident:
        # Whole-array block, constant index_map -> DMA'd once, stays in VMEM.
        xw_spec = pl.BlockSpec((n_pad, f_out_pad), lambda i, k: (0, 0))
    else:
        xw_spec = pl.BlockSpec((tile_k, f_out_pad), lambda i, k: (k, 0))

    if n_row * n_k >= 3:
        a_spec = pl.BlockSpec((tile_m, tile_k), lambda i, k: (i, k),
                              pipeline_mode=pl.Buffered(3))
    else:
        a_spec = pl.BlockSpec((tile_m, tile_k), lambda i, k: (i, k))

    kernel = functools.partial(
        _agg_kernel, apply_relu=apply_relu,
        xw_resident=xw_resident, tile_k=tile_k,
    )
    out = pl.pallas_call(
        kernel,
        out_shape=jax.ShapeDtypeStruct((n_pad, f_out_pad), out_dtype),
        grid=(n_row, n_k),
        in_specs=[
            a_spec,                                             # A_hat tile
            xw_spec,                                            # XW (resident)
            pl.BlockSpec((1, f_out_pad), lambda i, k: (0, 0)),  # bias
        ],
        out_specs=pl.BlockSpec((tile_m, f_out_pad), lambda i, k: (i, 0)),
        scratch_shapes=[pltpu.VMEM((tile_m, f_out_pad), jnp.float32)],
        compiler_params=pltpu.CompilerParams(
            dimension_semantics=("parallel", "arbitrary"),
            vmem_limit_bytes=VMEM_LIMIT,
        ),
    )(a_pad, xw, b_pad)
    return out


# ----------------------------------------------------------------------------
# Glue: sparse edge_index/edge_weight -> dense normalized adjacency, built
# directly at padded size and emitted as bf16 in one fused normalize+cast pass.
# Matches PyG gcn_norm: A_hat = D^{-1/2} (A + I) D^{-1/2}, add_self_loops=True.
# ----------------------------------------------------------------------------
def gcn_norm_dense_padded(edge_index, edge_weight, num_nodes, n_pad):
    src, dst = edge_index[0], edge_index[1]
    if edge_weight is None:
        edge_weight = jnp.ones(src.shape[0], dtype=jnp.float32)
    a = jnp.zeros((n_pad, n_pad), dtype=jnp.float32)
    a = a.at[dst, src].add(edge_weight.astype(jnp.float32))   # edge src -> dst
    diag = jnp.arange(num_nodes)
    a = a.at[diag, diag].add(1.0)                              # self loops
    deg = a.sum(axis=1)                                        # padded rows: 0
    dinv = jnp.where(deg > 0, jax.lax.rsqrt(deg), 0.0)
    # Single fused scale + cast; padded rows/cols remain exactly zero.
    return (dinv[:, None] * a * dinv[None, :]).astype(jnp.bfloat16)


# ----------------------------------------------------------------------------
# Full model forward
# ----------------------------------------------------------------------------
def gcn_forward(x, edge_index, edge_weight, params):
    n, f_in = x.shape
    n_cls = params["w2"].shape[1]

    # Lane-align features; tile A_hat at (tile_m, tile_k). For tiny graphs the
    # K tile collapses to the 128-rounded N; the row tile is shrunk so the
    # parallel row grid still has >= 2 entries (keeps both v7x TCs busy).
    tile_k = TILE_K if n >= TILE_K else _round_up(max(n, 1), LANE)
    n_pad = _round_up(n, tile_k)
    tile_m = _pick_row_tile(n_pad)
    f_in_pad = _round_up(f_in, LANE)

    # Build padded bf16 A_hat once, reuse for both layers.
    a_pad = gcn_norm_dense_padded(edge_index, edge_weight, n, n_pad)
    x_pad = _pad2d(x, n_pad, f_in_pad, jnp.bfloat16)

    # Layer 1: emit the hidden state directly as bf16 (MXU operand of layer 2).
    h_pad = gcn_layer(
        a_pad, x_pad, params["w1"], params["b1"],
        apply_relu=True, tile_m=tile_m, tile_k=tile_k, out_dtype=jnp.bfloat16,
    )
    # F.dropout(training=False) is the identity at inference.
    # TODO(synk): not implemented here: training-mode dropout, int8/fp8 A_hat
    # quantization, the VMEM-resident A_hat two-layer fusion (v5e/v6e 128 MiB,
    # v7x <=48 MiB budget), and a CSR row-gather formulation for genuinely
    # sparse / very large graphs (dense A_hat is O(N^2) HBM).
    y_pad = gcn_layer(
        a_pad, h_pad, params["w2"], params["b2"],
        apply_relu=False, tile_m=tile_m, tile_k=tile_k, out_dtype=jnp.float32,
    )
    return y_pad[:n, :n_cls]


# ----------------------------------------------------------------------------
# Main: deterministic params + small synthetic graph
# ----------------------------------------------------------------------------
if __name__ == "__main__":
    num_nodes = 8
    num_features = 16
    hidden = 32
    num_classes = 4

    key = jax.random.PRNGKey(0)
    k_x, k_w1, k_w2, k_ew = jax.random.split(key, 4)

    # Node features
    x = jax.random.normal(k_x, (num_nodes, num_features), dtype=jnp.float32)

    # Small ring graph, both directions
    src = jnp.arange(num_nodes, dtype=jnp.int32)
    dst = (src + 1) % num_nodes
    edge_index = jnp.stack(
        [jnp.concatenate([src, dst]), jnp.concatenate([dst, src])], axis=0
    )
    edge_weight = jax.random.uniform(
        k_ew, (edge_index.shape[1],), dtype=jnp.float32, minval=0.5, maxval=1.5
    )

    # Deterministic parameters (Glorot-ish scale); GCNConv bias inits to zero.
    params = {
        "w1": jax.random.normal(k_w1, (num_features, hidden), dtype=jnp.float32)
        * (1.0 / jnp.sqrt(num_features)),
        "b1": jnp.zeros((hidden,), dtype=jnp.float32),
        "w2": jax.random.normal(k_w2, (hidden, num_classes), dtype=jnp.float32)
        * (1.0 / jnp.sqrt(hidden)),
        "b2": jnp.zeros((num_classes,), dtype=jnp.float32),
    }

    out = gcn_forward(x, edge_index, edge_weight, params)
    jax.block_until_ready(out)
    assert out.shape == (num_nodes, num_classes)
    print("KERNEL_OK")
</pallas_src>

<mosaic_0001>
module attributes {stable_mosaic.version = 11 : i64} {
  func.func @_xw_kernel(%arg0: i32, %arg1: memref<64x128xbf16, #tpu.memory_space<vmem>>, %arg2: memref<128x128xbf16, #tpu.memory_space<vmem>>, %arg3: memref<64x128xbf16, #tpu.memory_space<vmem>>) attributes {dimension_semantics = [#tpu.dimension_semantics<parallel>], iteration_bounds = array<i64: 2>, scalar_prefetch = 0 : i64, scratch_operands = 0 : i64, tpu.core_type = #tpu.core_type<tc>, window_params = [{transform_indices = @transform_0, window_bounds = array<i64: 64, 128>}, {pipeline_mode = #tpu.pipeline_mode<synchronous>, transform_indices = @transform_1, window_bounds = array<i64: 128, 128>}, {transform_indices = @transform_2, window_bounds = array<i64: 64, 128>}]} {
    %c0 = arith.constant 0 : index
    %c0_0 = arith.constant 0 : index
    %0 = vector.load %arg1[%c0, %c0_0] : memref<64x128xbf16, #tpu.memory_space<vmem>>, vector<64x128xbf16>
    %c0_1 = arith.constant 0 : index
    %c0_2 = arith.constant 0 : index
    %1 = vector.load %arg2[%c0_1, %c0_2] : memref<128x128xbf16, #tpu.memory_space<vmem>>, vector<128x128xbf16>
    %cst = arith.constant dense<0.000000e+00> : vector<64x128xf32>
    %2 = tpu.matmul %0, %1, %cst {dimension_numbers = #tpu.dot_dimension_numbers<[1], [0], [0], [1], [0, 0, 1, 1], [], []>} : vector<64x128xbf16>, vector<128x128xbf16>, vector<64x128xf32> -> vector<64x128xf32>
    %3 = arith.truncf %2 : vector<64x128xf32> to vector<64x128xbf16>
    %c0_3 = arith.constant 0 : index
    %c0_4 = arith.constant 0 : index
    %4 = vector.load %arg3[%c0_3, %c0_4] : memref<64x128xbf16, #tpu.memory_space<vmem>>, vector<64x128xbf16>
    tpu.vector_store %arg3[%c0_3, %c0_4], %3 {strides = array<i32>} : memref<64x128xbf16, #tpu.memory_space<vmem>>, vector<64x128xbf16>,
    return
  }
  func.func @transform_0(%arg0: i32) -> (i32, i32) {
    %c0_i32 = arith.constant 0 : i32
    %c0_i32_0 = arith.constant 0 : i32
    return %arg0, %c0_i32 : i32, i32
  }
  func.func @transform_1(%arg0: i32) -> (i32, i32) {
    %c0_i32 = arith.constant 0 : i32
    %c0_i32_0 = arith.constant 0 : i32
    %c0_i32_1 = arith.constant 0 : i32
    return %c0_i32, %c0_i32_0 : i32, i32
  }
  func.func @transform_2(%arg0: i32) -> (i32, i32) {
    %c0_i32 = arith.constant 0 : i32
    %c0_i32_0 = arith.constant 0 : i32
    return %arg0, %c0_i32 : i32, i32
  }
}

</mosaic_0001>

<llo_original>
// kernel: tpu_custom_call.1
$region0: #{tpu_custom_call.1}
  #allocation0 [shape = 'u32[]', space=smem, size = 0x4, offset = 0x4, fixed_abs, tag = 'smem constant byte address 0x4 - core index']
  #allocation1 [shape = 'u32[72,128]{1,0:T(1,128)}', space=vmem, size = 0x9000, scoped, tag = 'internal scratch']
  %s0 = inlined_call_operand.hbm [shape: bf16[128,128], index: 0, kind: input, shape index: {}]
  %s1 = inlined_call_operand.hbm [shape: bf16[128,128], index: 1, kind: input, shape index: {}]
  %s2 = inlined_call_operand.hbm [shape: bf16[128,128], index: 2, kind: output, shape index: {}]
  %s3 = sld [smem:[#allocation0]]
  $region49: #{tpu_custom_call.1} parent=0
    _
  %s5 = ssub.s32 1, %s3
  %s6 = scalar_select 0, %s5, %s3
  $region1: #{tpu_custom_call.1} parent=0
    #allocation2 [shape = 'u8[32768]{0}', space=vmem, size = 0x8000, scoped, tag = 'input window, operand 0']
    #allocation3 [shape = 's32[2]{0}', space=sflag, size = 0x8, scoped, tag = 'scoped memory for tpu_custom_call.1']
    #allocation4 [shape = 's32[2]{0}', space=sflag, size = 0x8, scoped, tag = 'scoped memory for tpu_custom_call.1']
    #allocation5 [shape = 'u8[32768]{0}', space=vmem, size = 0x8000, scoped, tag = 'input window, operand 1, single buffered']
    #allocation6 [shape = 's32[1]{0}', space=sflag, size = 0x4, scoped, tag = 'scoped memory for tpu_custom_call.1']
    #allocation7 [shape = 'u8[32768]{0}', space=vmem, size = 0x8000, scoped, tag = 'output window, operand 0']
    %7 = vsyncpa [#allocation3], 0
    %s8 = scalar_lea.sflag [#allocation3], 1
    %9 = vsyncpa %s8, 0
    %10 = vsyncpa [#allocation6], 0
    %11 = vsyncpa [#allocation4], 0
    %s12 = scalar_lea.sflag [#allocation4], 1
    %13 = vsyncpa %s12, 0
    loop: start=0, step=1, limit=4
    $region2: #{tpu_custom_call.1} parent=1 // loop_pre_header
      _
    $region3: #{tpu_custom_call.1} parent=1 // loop_header
      %s15 = sphi 0, %s19
      %p16 = scmp.ge.s32.totalorder %s15, 4
      %s25 = sphi 0, %s27
      %s28 = sphi 0, %s25
      %s29 = sphi 0, %s28
      %s45 = sphi 0, %s29
      %s49 = sphi 0, %s49
      %s51 = sphi 0, %s49
      %s52 = sphi 0, %s51
      %s66 = sphi 0, %s52
      %s72 = sphi 0, %s74
      %s75 = sphi 0, %s72
      %s76 = sphi 0, %s75
      %s92 = sphi 0, %s76
    $region4: #{tpu_custom_call.1} parent=1 // loop_header_branch
      %18 = sbr.rel (%p16) target = $region8
    $region5: #{tpu_custom_call.1} parent=1 // loop_body
      %s20 = ssub.s32 %s15, 1
      %s21 = ssub.s32 %s15, 2
      %s22 = sadd.s32 %s15, 1
      %s23 = ssub.s32 %s15, %s22
      %p24 = scmp.eq.s32.totalorder %s23, 0
      %s26 = sadd.s32 %s25, 1
      %s27 = scalar_select %p24, %s25, %s26
      %p30 = pneg %p24
      %p31 = scmp.eq.s32.totalorder %s15, 1
      %p32 = por %p30, %p31
      %p33 = scmp.ne.s32.totalorder %s25, %s28
      %p34 = scmp.eq.s32.totalorder %s15, 0
      %p35 = por %p33, %p34
      %p36 = scmp.ne.s32.totalorder %s25, %s28
      %p37 = scmp.eq.s32.totalorder %s20, 1
      %p38 = por %p36, %p37
      %p39 = scmp.ne.s32.totalorder %s28, %s29
      %p40 = scmp.eq.s32.totalorder %s20, 0
      %p41 = por %p39, %p40
      %p42 = scmp.ne.s32.totalorder %s28, %s29
      %p43 = scmp.eq.s32.totalorder %s21, 1
      %p44 = por %p42, %p43
      %p46 = scmp.ne.s32.totalorder %s29, %s45
      %p47 = scmp.eq.s32.totalorder %s21, 0
      %p48 = por %p46, %p47
      %s50 = sadd.s32 %s49, 1
      %p53 = scmp.eq.s32.totalorder %s15, 1
      %p54 = scmp.ne.s32.totalorder %s49, %s51
      %p55 = scmp.eq.s32.totalorder %s15, 0
      %p56 = por %p54, %p55
      %p57 = scmp.ne.s32.totalorder %s49, %s51
      %p58 = scmp.eq.s32.totalorder %s20, 1
      %p59 = por %p57, %p58
      %p60 = scmp.ne.s32.totalorder %s51, %s52
      %p61 = scmp.eq.s32.totalorder %s20, 0
      %p62 = por %p60, %p61
      %p63 = scmp.ne.s32.totalorder %s51, %s52
      %p64 = scmp.eq.s32.totalorder %s21, 1
      %p65 = por %p63, %p64
      %p67 = scmp.ne.s32.totalorder %s52, %s66
      %p68 = scmp.eq.s32.totalorder %s21, 0
      %p69 = por %p67, %p68
      %s70 = ssub.s32 %s15, %s22
      %p71 = scmp.eq.s32.totalorder %s70, 0
      %s73 = sadd.s32 %s72, 1
      %s74 = scalar_select %p71, %s72, %s73
      %p77 = pneg %p71
      %p78 = scmp.eq.s32.totalorder %s15, 1
      %p79 = por %p77, %p78
      %p80 = scmp.ne.s32.totalorder %s72, %s75
      %p81 = scmp.eq.s32.totalorder %s15, 0
      %p82 = por %p80, %p81
      %p83 = scmp.ne.s32.totalorder %s72, %s75
      %p84 = scmp.eq.s32.totalorder %s20, 1
      %p85 = por %p83, %p84
      %p86 = scmp.ne.s32.totalorder %s75, %s76
      %p87 = scmp.eq.s32.totalorder %s20, 0
      %p88 = por %p86, %p87
      %p89 = scmp.ne.s32.totalorder %s75, %s76
      %p90 = scmp.eq.s32.totalorder %s21, 1
      %p91 = por %p89, %p90
      %p93 = scmp.ne.s32.totalorder %s76, %s92
      %p94 = scmp.eq.s32.totalorder %s21, 0
      %p95 = por %p93, %p94
      %p96 = scmp.le.s32.totalorder 1, %s15
      %p97 = scmp.lt.s32.totalorder %s15, 3
      %p98 = pnand %p96, %p97
      %p99 = pneg %p98
      // Predicated region
      $region9: #{tpu_custom_call.1} parent=5 // pred_check
        _
      $region10: #{tpu_custom_call.1} parent=5 // pred_check_branch
        %101 = sbr.rel (%p98) target = $region12
      $region11: #{tpu_custom_call.1} parent=5 // pred_region
        %s102 = ssub.s32 %s15, 1
        // Predicated region
        $region13: #{tpu_custom_call.1} parent=11 // pred_check
          %p103 = pneg %p62
        $region14: #{tpu_custom_call.1} parent=11 // pred_check_branch
          %105 = sbr.rel (%p103) target = $region16
        $region15: #{tpu_custom_call.1} parent=11 // pred_region
          %107 = vsyncadd [#allocation6], 0
          %s108 = sshll.u32 %s1, 4
          %s109 = int_to_ptr.hbm [resolvable:$true] %s108
          %s110 = sshll.u32 [#allocation5], 4
          %s111 = int_to_ptr.vmem [resolvable:$true] %s110
          %116 = dma.hbm_to_vmem [thread:$0]  %s109, 1024, %s111, [#allocation6], 64, 64, 4
        $region16: #{tpu_custom_call.1} parent=11 // pred_fallthru
          _
      $region12: #{tpu_custom_call.1} parent=5 // pred_fallthru
        _
      %p117 = scmp.lt.s32.totalorder %s15, 2
      // Predicated region
      $region17: #{tpu_custom_call.1} parent=5 // pred_check
        %p118 = pneg %p117
      $region18: #{tpu_custom_call.1} parent=5 // pred_check_branch
        %120 = sbr.rel (%p118) target = $region20
      $region19: #{tpu_custom_call.1} parent=5 // pred_region
        // Predicated region
        $region21: #{tpu_custom_call.1} parent=19 // pred_check
          %p121 = pneg %p35
        $region22: #{tpu_custom_call.1} parent=19 // pred_check_branch
          %123 = sbr.rel (%p121) target = $region24
        $region23: #{tpu_custom_call.1} parent=19 // pred_region
          %s124 = sand.u32 %s25, 1
          %s125 = scalar_lea.sflag [#allocation3], %s124
          %s126 = sand.u32 %s25, 1
          %s127 = smul.addr %s126, 32
          %s128 = scalar_lea.vmem [#allocation2], %s127
          %s129 = smul.u32 8, %s15
          %131 = vsyncadd %s125, 0
          %s132 = smul.addr %s129, 4
          %s133 = scalar_lea.hbm %s0, %s132
          %s134 = sshll.u32 %s133, 4
          %s135 = int_to_ptr.hbm [resolvable:$true] %s134
          %s136 = sshll.u32 %s128, 4
          %s137 = int_to_ptr.vmem [resolvable:$true] %s136
          %142 = dma.hbm_to_vmem [thread:$0]  %s135, 512, %s137, %s125, 64, 64, 4
        $region24: #{tpu_custom_call.1} parent=19 // pred_fallthru
          _
      $region20: #{tpu_custom_call.1} parent=5 // pred_fallthru
        _
      %p143 = scmp.le.s32.totalorder 1, %s15
      %p144 = scmp.lt.s32.totalorder %s15, 3
      %p145 = pnand %p143, %p144
      %p146 = pneg %p145
      // Predicated region
      $region25: #{tpu_custom_call.1} parent=5 // pred_check
        _
      $region26: #{tpu_custom_call.1} parent=5 // pred_check_branch
        %148 = sbr.rel (%p145) target = $region28
      $region27: #{tpu_custom_call.1} parent=5 // pred_region
        %s149 = ssub.s32 %s15, 1
        %s150 = sand.u32 %s28, 1
        %s151 = scalar_lea.sflag [#allocation3], %s150
        %s152 = sand.u32 %s28, 1
        %s153 = smul.addr %s152, 32
        %s154 = scalar_lea.vmem [#allocation2], %s153
        // Predicated region
        $region29: #{tpu_custom_call.1} parent=27 // pred_check
          %p155 = pneg %p41
        $region30: #{tpu_custom_call.1} parent=27 // pred_check_branch
          %157 = sbr.rel (%p155) target = $region32
        $region31: #{tpu_custom_call.1} parent=27 // pred_region
          %159 = dma.done %s151, 512
        $region32: #{tpu_custom_call.1} parent=27 // pred_fallthru
          _
        // Predicated region
        $region33: #{tpu_custom_call.1} parent=27 // pred_check
          %p160 = pneg %p62
        $region34: #{tpu_custom_call.1} parent=27 // pred_check_branch
          %162 = sbr.rel (%p160) target = $region36
        $region35: #{tpu_custom_call.1} parent=27 // pred_region
          %164 = dma.done [#allocation6], 1024
        $region36: #{tpu_custom_call.1} parent=27 // pred_fallthru
          _
        %s165 = sand.u32 %s28, 1
        %s166 = scalar_lea.sflag [#allocation3], %s165
        %s167 = sand.u32 %s28, 1
        %s168 = smul.addr %s167, 32
        %s169 = scalar_lea.vmem [#allocation2], %s168
        %p170 = pneg %p41
        %p171 = pneg %p38
        %p172 = pneg %p62
        %p173 = pneg %p59
        %p174 = pneg %p88
        %p175 = pneg %p85
        %s176 = sand.u32 %s75, 1
        %s177 = scalar_lea.sflag [#allocation4], %s176
        %s178 = sand.u32 %s75, 1
        %s179 = smul.addr %s178, 32
        %s180 = scalar_lea.vmem [#allocation7], %s179
        %s181 = smul.u32 8, %s20
        %s182 = smul.u32 8, %s20
        %v183 = vld [vmem:[%s154] sm:$0xf]
        %v184 = vld [vmem:[%s154 + $0x4] sm:$0xf]
        %v185 = vld [vmem:[%s154 + $0x8] sm:$0xf]
        %v186 = vld [vmem:[%s154 + $0xc] sm:$0xf]
        %v187 = vld [vmem:[%s154 + $0x10] sm:$0xf]
        %v188 = vld [vmem:[%s154 + $0x14] sm:$0xf]
        %v189 = vld [vmem:[%s154 + $0x18] sm:$0xf]
        %v190 = vld [vmem:[%s154 + $0x1c] sm:$0xf]
        %v191 = vld [vmem:[#allocation5] sm:$0xf]
        %v192 = vld [vmem:[#allocation5 + $0x4] sm:$0xf]
        %v193 = vld [vmem:[#allocation5 + $0x8] sm:$0xf]
        %v194 = vld [vmem:[#allocation5 + $0xc] sm:$0xf]
        %v195 = vld [vmem:[#allocation5 + $0x10] sm:$0xf]
        %v196 = vld [vmem:[#allocation5 + $0x14] sm:$0xf]
        %v197 = vld [vmem:[#allocation5 + $0x18] sm:$0xf]
        %v198 = vld [vmem:[#allocation5 + $0x1c] sm:$0xf]
        %v199 = vld [vmem:[#allocation5 + $0x20] sm:$0xf]
        %v200 = vld [vmem:[#allocation5 + $0x24] sm:$0xf]
        %v201 = vld [vmem:[#allocation5 + $0x28] sm:$0xf]
        %v202 = vld [vmem:[#allocation5 + $0x2c] sm:$0xf]
        %v203 = vld [vmem:[#allocation5 + $0x30] sm:$0xf]
        %v204 = vld [vmem:[#allocation5 + $0x34] sm:$0xf]
        %v205 = vld [vmem:[#allocation5 + $0x38] sm:$0xf]
        %v206 = vld [vmem:[#allocation5 + $0x3c] sm:$0xf]
        %v215 = vunpack.c.l.b16 %v183
        %v216 = vunpack.c.l.b16 %v184
        %v217 = vunpack.c.l.b16 %v185
        %v218 = vunpack.c.l.b16 %v186
        %v219 = vunpack.c.l.b16 %v187
        %v220 = vunpack.c.l.b16 %v188
        %v221 = vunpack.c.l.b16 %v189
        %v222 = vunpack.c.l.b16 %v190
        %v223 = vpack.c.b16 %v216, %v215
        %v224 = vpack.c.b16 %v218, %v217
        %v225 = vpack.c.b16 %v220, %v219
        %v226 = vpack.c.b16 %v222, %v221
        %v247 = vunpack.c.l.b16 %v191
        %v248 = vunpack.c.l.b16 %v192
        %v249 = vunpack.c.l.b16 %v193
        %v250 = vunpack.c.l.b16 %v194
        %v251 = vunpack.c.l.b16 %v195
        %v252 = vunpack.c.l.b16 %v196
        %v253 = vunpack.c.l.b16 %v197
        %v254 = vunpack.c.l.b16 %v198
        %v255 = vunpack.c.l.b16 %v199
        %v256 = vunpack.c.l.b16 %v200
        %v257 = vunpack.c.l.b16 %v201
        %v258 = vunpack.c.l.b16 %v202
        %v259 = vunpack.c.l.b16 %v203
        %v260 = vunpack.c.l.b16 %v204
        %v261 = vunpack.c.l.b16 %v205
        %v262 = vunpack.c.l.b16 %v206
        %v263 = vpack.c.b16 %v248, %v247
        %v264 = vpack.c.b16 %v250, %v249
        %v265 = vpack.c.b16 %v252, %v251
        %v266 = vpack.c.b16 %v254, %v253
        %v267 = vpack.c.b16 %v256, %v255
        %v268 = vpack.c.b16 %v258, %v257
        %v269 = vpack.c.b16 %v260, %v259
        %v270 = vpack.c.b16 %v262, %v261
        %279 = vmatpush.bf16.msra.mxu0 %v270
        %280 = vmatpush.bf16.msra.mxu0 %v269
        %281 = vmatpush.bf16.msra.mxu0 %v268
        %282 = vmatpush.bf16.msra.mxu0 %v267
        %283 = vmatpush.bf16.msra.mxu0 %v266
        %284 = vmatpush.bf16.msra.mxu0 %v265
        %285 = vmatpush.bf16.msra.mxu0 %v264
        %286 = vmatpush.bf16.msra.mxu0 %v263
        %287 = vmatmul.bf16.gmra.mxu0 %v223
        %v288 = vpop.f32.mrf.mxu0
        %v289 = vadd.f32 0.0, %v288
        %v290 = vpop.f32.mrf.mxu0
        %v291 = vadd.f32 0.0, %v290
        %292 = vmatmul.bf16.gmra.mxu0 %v224
        %v293 = vpop.f32.mrf.mxu0
        %v294 = vadd.f32 0.0, %v293
        %v295 = vpop.f32.mrf.mxu0
        %v296 = vadd.f32 0.0, %v295
        %297 = vmatmul.bf16.gmra.mxu0 %v225
        %v298 = vpop.f32.mrf.mxu0
        %v299 = vadd.f32 0.0, %v298
        %v300 = vpop.f32.mrf.mxu0
        %v301 = vadd.f32 0.0, %v300
        %302 = vmatmul.bf16.gmra.mxu0 %v226
        %v303 = vpop.f32.mrf.mxu0
        %v304 = vadd.f32 0.0, %v303
        %v305 = vpop.f32.mrf.mxu0
        %v306 = vadd.f32 0.0, %v305
        %307 = vdwg.mxu0
        %v308 = vpack.c.bf16 %v289, %v289
        %v309 = vpack.c.bf16 %v291, %v291
        %v310 = vpack.c.bf16 %v294, %v294
        %v311 = vpack.c.bf16 %v296, %v296
        %v312 = vpack.c.bf16 %v299, %v299
        %v313 = vpack.c.bf16 %v301, %v301
        %v314 = vpack.c.bf16 %v304, %v304
        %v315 = vpack.c.bf16 %v306, %v306
        %316 = vst [vmem:[%s180] sm:$0xf] %v308
        %317 = vst [vmem:[%s180 + $0x4] sm:$0xf] %v309
        %318 = vst [vmem:[%s180 + $0x8] sm:$0xf] %v310
        %319 = vst [vmem:[%s180 + $0xc] sm:$0xf] %v311
        %320 = vst [vmem:[%s180 + $0x10] sm:$0xf] %v312
        %321 = vst [vmem:[%s180 + $0x14] sm:$0xf] %v313
        %322 = vst [vmem:[%s180 + $0x18] sm:$0xf] %v314
        %323 = vst [vmem:[%s180 + $0x1c] sm:$0xf] %v315
        %s324 = sand.u32 %s75, 1
        %s325 = scalar_lea.sflag [#allocation4], %s324
        %s326 = sand.u32 %s75, 1
        %s327 = smul.addr %s326, 32
        %s328 = scalar_lea.vmem [#allocation7], %s327
        // Predicated region
        $region37: #{tpu_custom_call.1} parent=27 // pred_check
          %p329 = pneg %p85
        $region38: #{tpu_custom_call.1} parent=27 // pred_check_branch
          %331 = sbr.rel (%p329) target = $region40
        $region39: #{tpu_custom_call.1} parent=27 // pred_region
          %s332 = smul.u32 8, %s20
          %334 = vsyncadd %s325, 0
          %s335 = smul.addr %s332, 4
          %s336 = scalar_lea.hbm %s2, %s335
          %s337 = sshll.u32 %s328, 4
          %s338 = int_to_ptr.vmem [resolvable:$true] %s337
          %s339 = sshll.u32 %s336, 4
          %s340 = int_to_ptr.hbm [resolvable:$true] %s339
          %345 = dma.vmem_to_hbm [thread:$0]  %s338, 512, %s340, %s325, 64, 64, 4
        $region40: #{tpu_custom_call.1} parent=27 // pred_fallthru
          _
      $region28: #{tpu_custom_call.1} parent=5 // pred_fallthru
        _
      %p346 = scmp.le.s32.totalorder 2, %s15
      // Predicated region
      $region41: #{tpu_custom_call.1} parent=5 // pred_check
        %p347 = pneg %p346
      $region42: #{tpu_custom_call.1} parent=5 // pred_check_branch
        %349 = sbr.rel (%p347) target = $region44
      $region43: #{tpu_custom_call.1} parent=5 // pred_region
        %s350 = ssub.s32 %s15, 2
        // Predicated region
        $region45: #{tpu_custom_call.1} parent=43 // pred_check
          %p351 = pneg %p91
        $region46: #{tpu_custom_call.1} parent=43 // pred_check_branch
          %353 = sbr.rel (%p351) target = $region48
        $region47: #{tpu_custom_call.1} parent=43 // pred_region
          %s354 = sand.u32 %s76, 1
          %s355 = scalar_lea.sflag [#allocation4], %s354
          %s356 = sand.u32 %s76, 1
          %s357 = smul.addr %s356, 32
          %s358 = scalar_lea.vmem [#allocation7], %s357
          %360 = dma.done %s355, 512
        $region48: #{tpu_custom_call.1} parent=43 // pred_fallthru
          _
      $region44: #{tpu_custom_call.1} parent=5 // pred_fallthru
        _
    $region6: #{tpu_custom_call.1} parent=1 // loop_footer
      %s19 = sadd.s32 1, %s15
    $region7: #{tpu_custom_call.1} parent=1 // loop_footer_branch
      %14 = sbr.rel target = $region3
    $region8: #{tpu_custom_call.1} parent=1 // loop_exit
      _
    %361 = vsyncpa [#allocation3], 1
    %s362 = scalar_lea.sflag [#allocation3], 1
    %363 = vsyncpa %s362, 1
    %364 = vsyncpa [#allocation6], 1
    %365 = vsyncpa [#allocation4], 1
    %s366 = scalar_lea.sflag [#allocation4], 1
    %367 = vsyncpa %s366, 1

</llo_original>
